<compile_context>
chip_gen: v6e
topology: v6e:2x2x1
jax: 0.10.0
libtpu: 0.0.40
codegen_flags: <defaults>
</compile_context>

<pallas_src>
import functools

import jax
import jax.numpy as jnp
from jax.experimental import pallas as pl
from jax.experimental.pallas import tpu as pltpu


def _round_up(x, m):
    return ((x + m - 1) // m) * m


def _focal_loss_kernel(x_ref, t_ref, alpha_ref, out_ref, acc_ref, *,
                       gamma, smooth, epsilon, n_valid):
    # x_ref:     (C, BN) logits block, native dtype; samples lane-dense.
    # t_ref:     (1, BN) int32 class ids; -1 marks padded columns.
    # alpha_ref: (C, 1)  float32 per-class weights.
    # out_ref:   (1, 1)  SMEM scalar result.
    # acc_ref:   (2,)    SMEM running sums [sum_alpha, sum_focal].
    pid = pl.program_id(0)

    @pl.when(pid == 0)
    def _init():
        acc_ref[0] = jnp.float32(0.0)
        acc_ref[1] = jnp.float32(0.0)

    x = x_ref[...].astype(jnp.float32)            # (C, BN)
    t = t_ref[...]                                # (1, BN) int32
    alpha = alpha_ref[...]                        # (C, 1)  f32
    c, bn = x.shape

    # Numerically stable softmax pieces; class reduction is over sublanes.
    m = jnp.max(x, axis=0, keepdims=True)         # (1, BN)
    e = jnp.exp(x - m)                            # (C, BN)  only big EUP op
    s = jnp.sum(e, axis=0, keepdims=True)         # (1, BN)

    # One-hot "hit" mask built in-register (no gather/scatter).  Padded
    # columns carry t == -1 and never match.
    cls = jax.lax.broadcasted_iota(jnp.int32, (c, bn), 0)
    hit = (cls == t).astype(jnp.float32)          # (C, BN)

    e_t = jnp.sum(hit * e, axis=0, keepdims=True)  # (1, BN)
    p_t = e_t / s                                  # (1, BN) small exact divide

    # Label smoothing closed form: clamp(one_hot, sm, 1-sm) . p
    #   = sm*sum(p) + (1-2sm)*p_t = sm + (1-2sm)*p_t   (sum(p) == 1)
    if smooth is not None:
        pt = smooth + (1.0 - 2.0 * smooth) * p_t + epsilon
    else:
        pt = p_t + epsilon
    log_pt = jnp.log(pt)

    q = 1.0 - pt
    if float(gamma) == int(gamma):
        g = int(gamma)
        if g <= 0:
            qg = jnp.ones_like(q)
        else:
            qg = q
            for _ in range(g - 1):                 # stays on the VPU
                qg = qg * q
    else:
        # Clamp avoids NaN when pt = 1 + epsilon under fractional gamma.
        qg = jnp.exp(gamma * jnp.log(jnp.maximum(q, 0.0)))

    valid = (t >= 0).astype(jnp.float32)           # (1, BN) padding mask
    focal = -qg * log_pt * valid                   # (1, BN)
    a = jnp.sum(hit * alpha, axis=0, keepdims=True)  # (1, BN) == alpha[target]

    acc_ref[0] = acc_ref[0] + jnp.sum(a)
    acc_ref[1] = acc_ref[1] + jnp.sum(focal)

    @pl.when(pid == pl.num_programs(0) - 1)
    def _finalize():
        # PyTorch broadcasting quirk: loss has shape (N,1,N), so
        # loss.mean() == mean(alpha_gathered) * mean(focal).
        denom = jnp.float32(n_valid) * jnp.float32(n_valid)
        out_ref[0, 0] = acc_ref[0] * acc_ref[1] / denom


def focal_loss_many_classification(input_, target, *, num_class, alpha=None,
                                   gamma=2, smooth=None, epsilon=1e-19,
                                   block_n=1024):
    """JAX/Pallas equivalent of FocalLossManyClassification.forward."""
    if input_.ndim != 2:
        raise ValueError('The input dimension should be 2')
    if smooth is not None and (smooth < 0 or smooth > 1.0):
        raise ValueError('Smooth value should be in [0,1]')

    if alpha is None:
        alpha_vec = jnp.ones((num_class,), jnp.float32)      # not normalized (as in torch)
    elif isinstance(alpha, (list, tuple)):
        assert len(alpha) == num_class
        alpha_vec = jnp.asarray(alpha, jnp.float32)
        alpha_vec = alpha_vec / jnp.sum(alpha_vec)
    else:
        raise TypeError('Not support alpha type')

    n, c = input_.shape
    assert c == num_class

    # Lane-dense layout: samples along the 128-lane axis, classes on sublanes.
    lane = 128
    block_n = max(lane, _round_up(min(block_n, _round_up(n, lane)), lane))
    n_pad = _round_up(n, block_n)
    num_blocks = n_pad // block_n

    x_t = input_.T                                     # (C, N), native dtype (no f32 upcast)
    t_row = target.reshape(1, n).astype(jnp.int32)     # (1, N)
    if n_pad != n:
        x_t = jnp.pad(x_t, ((0, 0), (0, n_pad - n)))
        t_row = jnp.pad(t_row, ((0, 0), (0, n_pad - n)), constant_values=-1)
    alpha_col = alpha_vec.reshape(c, 1)

    kernel = functools.partial(_focal_loss_kernel, gamma=gamma, smooth=smooth,
                               epsilon=epsilon, n_valid=n)

    out = pl.pallas_call(
        kernel,
        out_shape=jax.ShapeDtypeStruct((1, 1), jnp.float32),
        grid_spec=pltpu.PrefetchScalarGridSpec(
            num_scalar_prefetch=0,
            grid=(num_blocks,),
            in_specs=[
                pl.BlockSpec((c, block_n), lambda i: (0, i)),   # logits tile
                pl.BlockSpec((1, block_n), lambda i: (0, i)),   # targets tile
                pl.BlockSpec((c, 1), lambda i: (0, 0)),         # alpha (resident)
            ],
            out_specs=pl.BlockSpec((1, 1), lambda i: (0, 0),
                                   memory_space=pltpu.MemorySpace.SMEM),
            scratch_shapes=[pltpu.SMEM((2,), jnp.float32)],
        ),
        compiler_params=pltpu.CompilerParams(
            dimension_semantics=("arbitrary",),        # serial scalar accumulator
            vmem_limit_bytes=32 * 1024 * 1024,         # safe on v5e/v6e/v7x
        ),
    )(x_t, t_row, alpha_col)
    # TODO(synk): for v7x 2-TC sharding, emit per-block partial sums with a
    # "parallel" axis and combine mean(a)*mean(focal) in the wrapper.
    return out[0, 0]


def _reference_loss(x, t, num_class, alpha, gamma, smooth, epsilon):
    """Pure-JAX reference reproducing the exact PyTorch broadcasting."""
    if alpha is None:
        alpha_vec = jnp.ones((num_class,), jnp.float32)
    else:
        alpha_vec = jnp.asarray(alpha, jnp.float32)
        alpha_vec = alpha_vec / jnp.sum(alpha_vec)
    p = jax.nn.softmax(x.astype(jnp.float32), axis=1)
    oh = jax.nn.one_hot(t, num_class, dtype=jnp.float32)
    if smooth is not None:
        oh = jnp.clip(oh, smooth, 1.0 - smooth)
    pt = jnp.sum(oh * p, axis=1) + epsilon
    log_pt = jnp.log(pt)
    a = alpha_vec[t]
    focal = -((1.0 - pt) ** gamma) * log_pt
    return jnp.mean(a) * jnp.mean(focal)     # == mean of the (N,1,N) broadcast


if __name__ == "__main__":
    key = jax.random.PRNGKey(0)
    k_x, k_t = jax.random.split(key)

    N, C = 300, 16
    x = jax.random.normal(k_x, (N, C), dtype=jnp.float32)
    t = jax.random.randint(k_t, (N,), 0, C, dtype=jnp.int32)

    # Case 1: defaults; block_n=128 -> 3-step grid with a padded tail block.
    loss1 = focal_loss_many_classification(x, t, num_class=C, block_n=128)
    ref1 = _reference_loss(x, t, C, None, 2, None, 1e-19)

    # Case 2: per-class alpha list + label smoothing.
    alpha_list = [float(i + 1) for i in range(C)]
    loss2 = focal_loss_many_classification(x, t, num_class=C, alpha=alpha_list,
                                           gamma=2, smooth=0.1, block_n=128)
    ref2 = _reference_loss(x, t, C, alpha_list, 2, 0.1, 1e-19)

    # Case 3: bf16 logits (native-dtype HBM traffic) + fractional gamma path.
    xb = x.astype(jnp.bfloat16)
    loss3 = focal_loss_many_classification(xb, t, num_class=C, gamma=1.5)
    ref3 = _reference_loss(xb, t, C, None, 1.5, None, 1e-19)

    jax.block_until_ready((loss1, loss2, loss3))

    assert jnp.allclose(loss1, ref1, atol=1e-5, rtol=1e-5), (loss1, ref1)
    assert jnp.allclose(loss2, ref2, atol=1e-5, rtol=1e-5), (loss2, ref2)
    assert jnp.allclose(loss3, ref3, atol=1e-5, rtol=1e-5), (loss3, ref3)

    print("KERNEL_OK")
</pallas_src>

<mosaic_0001>
module attributes {stable_mosaic.version = 11 : i64} {
  func.func @_focal_loss_kernel(%arg0: i32, %arg1: memref<16x128xf32, #tpu.memory_space<vmem>>, %arg2: memref<1x128xi32, #tpu.memory_space<vmem>>, %arg3: memref<16x1xf32, #tpu.memory_space<vmem>>, %arg4: memref<1x1xf32, #tpu.memory_space<smem>>, %arg5: memref<2xf32, #tpu.memory_space<smem>>) attributes {dimension_semantics = [#tpu.dimension_semantics<arbitrary>], iteration_bounds = array<i64: 3>, scalar_prefetch = 0 : i64, scratch_operands = 1 : i64, tpu.core_type = #tpu.core_type<tc>, window_params = [{transform_indices = @transform_0, window_bounds = array<i64: 16, 128>}, {transform_indices = @transform_1, window_bounds = array<i64: 1, 128>}, {pipeline_mode = #tpu.pipeline_mode<synchronous>, transform_indices = @transform_2, window_bounds = array<i64: 16, 1>}, {transform_indices = @transform_3, window_bounds = array<i64: 1, 1>}]} {
    %c0_i32 = arith.constant 0 : i32
    %0 = arith.cmpi eq, %arg0, %c0_i32 : i32
    %1 = arith.extui %0 : i1 to i32
    %c0_i32_0 = arith.constant 0 : i32
    %2 = arith.cmpi ne, %1, %c0_i32_0 : i32
    scf.if %2 {
      %cst_19 = arith.constant 0.000000e+00 : f32
      %c0_20 = arith.constant 0 : index
      %57 = memref.load %arg5[%c0_20] : memref<2xf32, #tpu.memory_space<smem>>
      memref.store %cst_19, %arg5[%c0_20] : memref<2xf32, #tpu.memory_space<smem>>
      %cst_21 = arith.constant 0.000000e+00 : f32
      %c1_22 = arith.constant 1 : index
      %58 = memref.load %arg5[%c1_22] : memref<2xf32, #tpu.memory_space<smem>>
      memref.store %cst_21, %arg5[%c1_22] : memref<2xf32, #tpu.memory_space<smem>>
    } else {
    }
    %c0 = arith.constant 0 : index
    %c0_1 = arith.constant 0 : index
    %3 = vector.load %arg1[%c0, %c0_1] : memref<16x128xf32, #tpu.memory_space<vmem>>, vector<16x128xf32>
    %c0_2 = arith.constant 0 : index
    %c0_3 = arith.constant 0 : index
    %4 = vector.load %arg2[%c0_2, %c0_3] : memref<1x128xi32, #tpu.memory_space<vmem>>, vector<1x128xi32>
    %c0_4 = arith.constant 0 : index
    %c0_5 = arith.constant 0 : index
    %5 = vector.load %arg3[%c0_4, %c0_5] : memref<16x1xf32, #tpu.memory_space<vmem>>, vector<16x1xf32>
    %cst = arith.constant dense<0xFF800000> : vector<128xf32>
    %6 = vector.multi_reduction <maximumf>, %3, %cst [0] : vector<16x128xf32> to vector<128xf32>
    %7 = vector.shape_cast %6 : vector<128xf32> to vector<1x128xf32>
    %8 = vector.broadcast %7 : vector<1x128xf32> to vector<16x128xf32>
    %9 = arith.subf %3, %8 : vector<16x128xf32>
    %10 = math.exp %9 : vector<16x128xf32>
    %cst_6 = arith.constant dense<0.000000e+00> : vector<128xf32>
    %11 = vector.multi_reduction <add>, %10, %cst_6 [0] : vector<16x128xf32> to vector<128xf32>
    %12 = vector.shape_cast %11 : vector<128xf32> to vector<1x128xf32>
    %13 = tpu.iota {dimensions = array<i32: 0>} : vector<16x128xi32>
    %14 = vector.broadcast %4 : vector<1x128xi32> to vector<16x128xi32>
    %15 = arith.cmpi eq, %13, %14 : vector<16x128xi32>
    %16 = arith.extui %15 : vector<16x128xi1> to vector<16x128xi32>
    %17 = arith.sitofp %16 : vector<16x128xi32> to vector<16x128xf32>
    %18 = arith.mulf %17, %10 : vector<16x128xf32>
    %cst_7 = arith.constant dense<0.000000e+00> : vector<128xf32>
    %19 = vector.multi_reduction <add>, %18, %cst_7 [0] : vector<16x128xf32> to vector<128xf32>
    %20 = vector.shape_cast %19 : vector<128xf32> to vector<1x128xf32>
    %21 = arith.divf %20, %12 : vector<1x128xf32>
    %cst_8 = arith.constant 9.99999968E-20 : f32
    %22 = vector.broadcast %cst_8 : f32 to vector<1x128xf32>
    %23 = arith.addf %21, %22 : vector<1x128xf32>
    %24 = math.log %23 : vector<1x128xf32>
    %cst_9 = arith.constant 1.000000e+00 : f32
    %25 = vector.broadcast %cst_9 : f32 to vector<1x128xf32>
    %26 = arith.subf %25, %23 : vector<1x128xf32>
    %27 = arith.mulf %26, %26 : vector<1x128xf32>
    %c0_i32_10 = arith.constant 0 : i32
    %28 = vector.broadcast %c0_i32_10 : i32 to vector<1x128xi32>
    %29 = arith.cmpi sge, %4, %28 : vector<1x128xi32>
    %30 = arith.extui %29 : vector<1x128xi1> to vector<1x128xi32>
    %31 = arith.sitofp %30 : vector<1x128xi32> to vector<1x128xf32>
    %cst_11 = arith.constant 0.000000e+00 : f32
    %32 = vector.broadcast %cst_11 : f32 to vector<1x128xf32>
    %33 = arith.subf %32, %27 : vector<1x128xf32>
    %34 = arith.mulf %33, %24 : vector<1x128xf32>
    %35 = arith.mulf %34, %31 : vector<1x128xf32>
    %36 = vector.broadcast %5 : vector<16x1xf32> to vector<16x128xf32>
    %37 = arith.mulf %17, %36 : vector<16x128xf32>
    %cst_12 = arith.constant dense<0.000000e+00> : vector<128xf32>
    %38 = vector.multi_reduction <add>, %37, %cst_12 [0] : vector<16x128xf32> to vector<128xf32>
    %39 = vector.shape_cast %38 : vector<128xf32> to vector<1x128xf32>
    %c0_13 = arith.constant 0 : index
    %40 = memref.load %arg5[%c0_13] : memref<2xf32, #tpu.memory_space<smem>>
    %41 = vector.shape_cast %39 : vector<1x128xf32> to vector<1x1x128xf32>
    %cst_14 = arith.constant dense<0.000000e+00> : vector<1xf32>
    %42 = vector.multi_reduction <add>, %41, %cst_14 [1, 2] : vector<1x1x128xf32> to vector<1xf32>
    %43 = vector.shape_cast %42 : vector<1xf32> to vector<1x1x1xf32>
    %44 = vector.extract %43[0, 0, 0] : f32 from vector<1x1x1xf32>
    %45 = arith.addf %40, %44 : f32
    %c0_15 = arith.constant 0 : index
    %46 = memref.load %arg5[%c0_15] : memref<2xf32, #tpu.memory_space<smem>>
    memref.store %45, %arg5[%c0_15] : memref<2xf32, #tpu.memory_space<smem>>
    %c1 = arith.constant 1 : index
    %47 = memref.load %arg5[%c1] : memref<2xf32, #tpu.memory_space<smem>>
    %48 = vector.shape_cast %35 : vector<1x128xf32> to vector<1x1x128xf32>
    %cst_16 = arith.constant dense<0.000000e+00> : vector<1xf32>
    %49 = vector.multi_reduction <add>, %48, %cst_16 [1, 2] : vector<1x1x128xf32> to vector<1xf32>
    %50 = vector.shape_cast %49 : vector<1xf32> to vector<1x1x1xf32>
    %51 = vector.extract %50[0, 0, 0] : f32 from vector<1x1x1xf32>
    %52 = arith.addf %47, %51 : f32
    %c1_17 = arith.constant 1 : index
    %53 = memref.load %arg5[%c1_17] : memref<2xf32, #tpu.memory_space<smem>>
    memref.store %52, %arg5[%c1_17] : memref<2xf32, #tpu.memory_space<smem>>
    %c2_i32 = arith.constant 2 : i32
    %54 = arith.cmpi eq, %arg0, %c2_i32 : i32
    %55 = arith.extui %54 : i1 to i32
    %c0_i32_18 = arith.constant 0 : i32
    %56 = arith.cmpi ne, %55, %c0_i32_18 : i32
    scf.if %56 {
      %cst_19 = arith.constant 3.000000e+02 : f32
      %cst_20 = arith.constant 3.000000e+02 : f32
      %57 = arith.mulf %cst_19, %cst_20 : f32
      %c0_21 = arith.constant 0 : index
      %58 = memref.load %arg5[%c0_21] : memref<2xf32, #tpu.memory_space<smem>>
      %c1_22 = arith.constant 1 : index
      %59 = memref.load %arg5[%c1_22] : memref<2xf32, #tpu.memory_space<smem>>
      %60 = arith.mulf %58, %59 : f32
      %61 = arith.divf %60, %57 : f32
      %c0_23 = arith.constant 0 : index
      %c0_24 = arith.constant 0 : index
      %62 = memref.load %arg4[%c0_23, %c0_24] : memref<1x1xf32, #tpu.memory_space<smem>>
      memref.store %61, %arg4[%c0_23, %c0_24] : memref<1x1xf32, #tpu.memory_space<smem>>
    } else {
    }
    return
  }
  func.func @transform_0(%arg0: i32) -> (i32, i32) {
    %c0_i32 = arith.constant 0 : i32
    %c0_i32_0 = arith.constant 0 : i32
    return %c0_i32, %arg0 : i32, i32
  }
  func.func @transform_1(%arg0: i32) -> (i32, i32) {
    %c0_i32 = arith.constant 0 : i32
    %c0_i32_0 = arith.constant 0 : i32
    return %c0_i32, %arg0 : i32, i32
  }
  func.func @transform_2(%arg0: i32) -> (i32, i32) {
    %c0_i32 = arith.constant 0 : i32
    %c0_i32_0 = arith.constant 0 : i32
    %c0_i32_1 = arith.constant 0 : i32
    return %c0_i32, %c0_i32_0 : i32, i32
  }
  func.func @transform_3(%arg0: i32) -> (i32, i32) {
    %c0_i32 = arith.constant 0 : i32
    %c0_i32_0 = arith.constant 0 : i32
    %c0_i32_1 = arith.constant 0 : i32
    return %c0_i32, %c0_i32_0 : i32, i32
  }
}

</mosaic_0001>

<llo_original>
// kernel: tpu_custom_call.1
$region0: #{tpu_custom_call.1}
  #allocation0 [shape = 'u32[]', space=smem, size = 0x4, offset = 0x4, fixed_abs, tag = 'smem constant byte address 0x4 - core index']
  #allocation1 [shape = 'u32[144,128]{1,0:T(1,128)}', space=vmem, size = 0x12000, scoped, tag = 'internal scratch']
  #allocation2 [shape = 'f32[2]{0:T(128)}', space=smem, size = 0x200, scoped, tag = 'scratch operand']
  %s0 = inlined_call_operand.hbm [shape: f32[16,384], index: 0, kind: input, shape index: {}]
  %s1 = inlined_call_operand.vmem [shape: s32[1,384], index: 1, kind: input, shape index: {}]
  %s2 = inlined_call_operand.vmem [shape: f32[16,1], index: 2, kind: input, shape index: {}]
  %s3 = inlined_call_operand.hbm [shape: f32[1,1], index: 3, kind: output, shape index: {}]
  %s4 = sld [smem:[#allocation0]]
  $region57: #{tpu_custom_call.1} parent=0
    _
  %s6 = ssub.s32 1, %s4
  %s7 = scalar_select 0, %s6, %s4
  $region1: #{tpu_custom_call.1} parent=0
    #allocation3 [shape = 'u8[16384]{0}', space=vmem, size = 0x4000, scoped, tag = 'input window, operand 0']
    #allocation4 [shape = 's32[2]{0}', space=sflag, size = 0x8, scoped, tag = 'scoped memory for tpu_custom_call.1']
    #allocation5 [shape = 's32[2]{0}', space=sflag, size = 0x8, scoped, tag = 'scoped memory for tpu_custom_call.1']
    #allocation6 [shape = 'u8[512]{0}', space=smem, size = 0x200, scoped, tag = 'output window, operand 0, single buffered']
    %8 = vsyncpa [#allocation4], 0
    %s9 = scalar_lea.sflag [#allocation4], 1
    %10 = vsyncpa %s9, 0
    %11 = vsyncpa [#allocation5], 0
    loop: start=0, step=1, limit=5
    $region2: #{tpu_custom_call.1} parent=1 // loop_pre_header
      _
    $region3: #{tpu_custom_call.1} parent=1 // loop_header
      %s13 = sphi 0, %s17
      %p14 = scmp.ge.s32.totalorder %s13, 5
      %s23 = sphi 0, %s25
      %s26 = sphi 0, %s23
      %s27 = sphi 0, %s26
      %s43 = sphi 0, %s27
      %s49 = sphi 0, %s51
      %s52 = sphi 0, %s49
      %s53 = sphi 0, %s52
      %s69 = sphi 0, %s53
      %s73 = sphi 0, %s73
      %s75 = sphi 0, %s73
      %s76 = sphi 0, %s75
      %s90 = sphi 0, %s76
      %s94 = sphi 0, %s94
      %s96 = sphi 0, %s94
      %s97 = sphi 0, %s96
      %s111 = sphi 0, %s97
    $region4: #{tpu_custom_call.1} parent=1 // loop_header_branch
      %16 = sbr.rel (%p14) target = $region8
    $region5: #{tpu_custom_call.1} parent=1 // loop_body
      %s18 = ssub.s32 %s13, 1
      %s19 = ssub.s32 %s13, 2
      %s20 = sadd.s32 %s13, 1
      %s21 = ssub.s32 %s13, %s20
      %p22 = scmp.eq.s32.totalorder %s21, 0
      %s24 = sadd.s32 %s23, 1
      %s25 = scalar_select %p22, %s23, %s24
      %p28 = pneg %p22
      %p29 = scmp.eq.s32.totalorder %s13, 2
      %p30 = por %p28, %p29
      %p31 = scmp.ne.s32.totalorder %s23, %s26
      %p32 = scmp.eq.s32.totalorder %s13, 0
      %p33 = por %p31, %p32
      %p34 = scmp.ne.s32.totalorder %s23, %s26
      %p35 = scmp.eq.s32.totalorder %s18, 2
      %p36 = por %p34, %p35
      %p37 = scmp.ne.s32.totalorder %s26, %s27
      %p38 = scmp.eq.s32.totalorder %s18, 0
      %p39 = por %p37, %p38
      %p40 = scmp.ne.s32.totalorder %s26, %s27
      %p41 = scmp.eq.s32.totalorder %s19, 2
      %p42 = por %p40, %p41
      %p44 = scmp.ne.s32.totalorder %s27, %s43
      %p45 = scmp.eq.s32.totalorder %s19, 0
      %p46 = por %p44, %p45
      %s47 = ssub.s32 %s13, %s20
      %p48 = scmp.eq.s32.totalorder %s47, 0
      %s50 = sadd.s32 %s49, 1
      %s51 = scalar_select %p48, %s49, %s50
      %p54 = pneg %p48
      %p55 = scmp.eq.s32.totalorder %s13, 2
      %p56 = por %p54, %p55
      %p57 = scmp.ne.s32.totalorder %s49, %s52
      %p58 = scmp.eq.s32.totalorder %s13, 0
      %p59 = por %p57, %p58
      %p60 = scmp.ne.s32.totalorder %s49, %s52
      %p61 = scmp.eq.s32.totalorder %s18, 2
      %p62 = por %p60, %p61
      %p63 = scmp.ne.s32.totalorder %s52, %s53
      %p64 = scmp.eq.s32.totalorder %s18, 0
      %p65 = por %p63, %p64
      %p66 = scmp.ne.s32.totalorder %s52, %s53
      %p67 = scmp.eq.s32.totalorder %s19, 2
      %p68 = por %p66, %p67
      %p70 = scmp.ne.s32.totalorder %s53, %s69
      %p71 = scmp.eq.s32.totalorder %s19, 0
      %p72 = por %p70, %p71
      %s74 = sadd.s32 %s73, 1
      %p77 = scmp.eq.s32.totalorder %s13, 2
      %p78 = scmp.ne.s32.totalorder %s73, %s75
      %p79 = scmp.eq.s32.totalorder %s13, 0
      %p80 = por %p78, %p79
      %p81 = scmp.ne.s32.totalorder %s73, %s75
      %p82 = scmp.eq.s32.totalorder %s18, 2
      %p83 = por %p81, %p82
      %p84 = scmp.ne.s32.totalorder %s75, %s76
      %p85 = scmp.eq.s32.totalorder %s18, 0
      %p86 = por %p84, %p85
      %p87 = scmp.ne.s32.totalorder %s75, %s76
      %p88 = scmp.eq.s32.totalorder %s19, 2
      %p89 = por %p87, %p88
      %p91 = scmp.ne.s32.totalorder %s76, %s90
      %p92 = scmp.eq.s32.totalorder %s19, 0
      %p93 = por %p91, %p92
      %s95 = sadd.s32 %s94, 1
      %p98 = scmp.eq.s32.totalorder %s13, 2
      %p99 = scmp.ne.s32.totalorder %s94, %s96
      %p100 = scmp.eq.s32.totalorder %s13, 0
      %p101 = por %p99, %p100
      %p102 = scmp.ne.s32.totalorder %s94, %s96
      %p103 = scmp.eq.s32.totalorder %s18, 2
      %p104 = por %p102, %p103
      %p105 = scmp.ne.s32.totalorder %s96, %s97
      %p106 = scmp.eq.s32.totalorder %s18, 0
      %p107 = por %p105, %p106
      %p108 = scmp.ne.s32.totalorder %s96, %s97
      %p109 = scmp.eq.s32.totalorder %s19, 2
      %p110 = por %p108, %p109
      %p112 = scmp.ne.s32.totalorder %s97, %s111
      %p113 = scmp.eq.s32.totalorder %s19, 0
      %p114 = por %p112, %p113
      %p115 = scmp.le.s32.totalorder 1, %s13
      %p116 = scmp.lt.s32.totalorder %s13, 4
      %p117 = pnand %p115, %p116
      %p118 = pneg %p117
      // Predicated region
      $region9: #{tpu_custom_call.1} parent=5 // pred_check
        _
      $region10: #{tpu_custom_call.1} parent=5 // pred_check_branch
        %120 = sbr.rel (%p117) target = $region12
      $region11: #{tpu_custom_call.1} parent=5 // pred_region
        %s121 = ssub.s32 %s13, 1
        // Predicated region
        $region13: #{tpu_custom_call.1} parent=11 // pred_check
          %p122 = pneg %p86
        $region14: #{tpu_custom_call.1} parent=11 // pred_check_branch
          %124 = sbr.rel (%p122) target = $region16
        $region15: #{tpu_custom_call.1} parent=11 // pred_region
          _
        $region16: #{tpu_custom_call.1} parent=11 // pred_fallthru
          _
      $region12: #{tpu_custom_call.1} parent=5 // pred_fallthru
        _
      %p125 = scmp.lt.s32.totalorder %s13, 3
      // Predicated region
      $region17: #{tpu_custom_call.1} parent=5 // pred_check
        %p126 = pneg %p125
      $region18: #{tpu_custom_call.1} parent=5 // pred_check_branch
        %128 = sbr.rel (%p126) target = $region20
      $region19: #{tpu_custom_call.1} parent=5 // pred_region
        // Predicated region
        $region21: #{tpu_custom_call.1} parent=19 // pred_check
          %p129 = pneg %p33
        $region22: #{tpu_custom_call.1} parent=19 // pred_check_branch
          %131 = sbr.rel (%p129) target = $region24
        $region23: #{tpu_custom_call.1} parent=19 // pred_region
          %s132 = sand.u32 %s23, 1
          %s133 = scalar_lea.sflag [#allocation4], %s132
          %s134 = sand.u32 %s23, 1
          %s135 = smul.addr %s134, 16
          %s136 = scalar_lea.vmem [#allocation3], %s135
          %s138 = ssub.s32 256, 256
          %139 = vsyncadd %s133, %s138
          %s140 = smul.addr %s13, 128
          %s141 = scalar_lea.hbm %s0, %s140
          %s142 = sshll.u32 %s136, 4
          %s143 = int_to_ptr.vmem [resolvable:$true] %s142
          %148 = dma.hbm_to_vmem [thread:$0]  %s141, 256, %s143, %s133, 384, 128, 8
        $region24: #{tpu_custom_call.1} parent=19 // pred_fallthru
          _
        // Predicated region
        $region25: #{tpu_custom_call.1} parent=19 // pred_check
          %p149 = pneg %p59
        $region26: #{tpu_custom_call.1} parent=19 // pred_check_branch
          %151 = sbr.rel (%p149) target = $region28
        $region27: #{tpu_custom_call.1} parent=19 // pred_region
          %p152 = scmp.lt.s32.totalorder %s13, 2
          %s153 = scalar_select %p152, %s13, 2
          %s154 = scalar_lea.vmem %s1, %s153
        $region28: #{tpu_custom_call.1} parent=19 // pred_fallthru
          _
      $region20: #{tpu_custom_call.1} parent=5 // pred_fallthru
        _
      %p155 = scmp.le.s32.totalorder 1, %s13
      %p156 = scmp.lt.s32.totalorder %s13, 4
      %p157 = pnand %p155, %p156
      %p158 = pneg %p157
      // Predicated region
      $region29: #{tpu_custom_call.1} parent=5 // pred_check
        _
      $region30: #{tpu_custom_call.1} parent=5 // pred_check_branch
        %160 = sbr.rel (%p157) target = $region32
      $region31: #{tpu_custom_call.1} parent=5 // pred_region
        %s161 = ssub.s32 %s13, 1
        %s162 = sand.u32 %s26, 1
        %s163 = scalar_lea.sflag [#allocation4], %s162
        %s164 = sand.u32 %s26, 1
        %s165 = smul.addr %s164, 16
        %s166 = scalar_lea.vmem [#allocation3], %s165
        // Predicated region
        $region33: #{tpu_custom_call.1} parent=31 // pred_check
          %p167 = pneg %p39
        $region34: #{tpu_custom_call.1} parent=31 // pred_check_branch
          %169 = sbr.rel (%p167) target = $region36
        $region35: #{tpu_custom_call.1} parent=31 // pred_region
          %170 = dma.done %s163, 256
        $region36: #{tpu_custom_call.1} parent=31 // pred_fallthru
          _
        %s171 = sand.u32 %s26, 1
        %s172 = scalar_lea.sflag [#allocation4], %s171
        %s173 = sand.u32 %s26, 1
        %s174 = smul.addr %s173, 16
        %s175 = scalar_lea.vmem [#allocation3], %s174
        %p176 = pneg %p39
        %p177 = pneg %p36
        %p178 = scmp.lt.s32.totalorder %s18, 2
        %s179 = scalar_select %p178, %s18, 2
        %s180 = scalar_lea.vmem %s1, %s179
        %p181 = pneg %p65
        %p182 = pneg %p62
        %p183 = pneg %p86
        %p184 = pneg %p83
        %p185 = pneg %p107
        %p186 = pneg %p104
        %p187 = scmp.lt.s32.totalorder %s18, 2
        %s188 = scalar_select %p187, %s18, 2
        %s189 = scalar_lea.vmem %s1, %s188
        %p190 = scmp.eq.s32.totalorder %s18, 0
        // Predicated region
        $region37: #{tpu_custom_call.1} parent=31 // pred_check
          %p191 = pneg %p190
        $region38: #{tpu_custom_call.1} parent=31 // pred_check_branch
          %193 = sbr.rel (%p191) target = $region40
        $region39: #{tpu_custom_call.1} parent=31 // pred_region
          %s194 = scalar_lea.smem [#allocation2], 0
          %195 = sst [smem:[%s194]] 0.0
          %s196 = scalar_lea.smem [#allocation2], 1
          %197 = sst [smem:[%s196]] 0.0
        $region40: #{tpu_custom_call.1} parent=31 // pred_fallthru
          _
        %v198 = vld [vmem:[%s166] sm:$0xff]
        %v199 = vld [vmem:[%s166 + $0x8] sm:$0xff]
        %v200 = vld [vmem:[%s189] sm:$0x1]
        %v201 = vld [vmem:[%s2] sm:$0xff]
        %v202 = vld [vmem:[%s2 + $0x8] sm:$0xff]
        %v203 = vmax.f32 %v198, %v199
        %v204 = vrot.slane %v203, 4
        %v205 = vmax.f32 %v203, %v204
        %v206 = vrot.slane %v205, 2
        %v207 = vmax.f32 %v205, %v206
        %v208 = vrot.slane %v207, 1
        %v209 = vmax.f32 %v207, %v208
        %v210 = vsub.f32 %v198, %v209
        %v211 = vsub.f32 %v199, %v209
        %v212 = vmul.f32 %v210, 1.442695
        %v213 = vpow.pop %v212
        %v214 = vmul.f32 %v211, 1.442695
        %v215 = vpow.pop %v214
        %v216 = vadd.f32 %v213, %v215
        %v217 = vrot.slane %v216, 4
        %v218 = vadd.f32 %v216, %v217
        %v219 = vrot.slane %v218, 2
        %v220 = vadd.f32 %v218, %v219
        %v221 = vrot.slane %v220, 1
        %v222 = vadd.f32 %v220, %v221
        %v223 = vlaneseq
        %v224 = vshrl.u32 %v223, 7
        %v225 = vadd.s32 %v224, 8
        %v226 = vlaneseq
        %v227 = vshrl.u32 %v226, 7
        %v228 = vsub.s32 0, %v227
        %v229 = vrot.slane %v200, %v228
        %vm230 = vcmp.eq.s32.totalorder %v224, %v229
        %vm231 = vcmp.eq.s32.totalorder %v225, %v229
        %v232 = vsel %vm230, 1, 0
        %v233 = vsel %vm231, 1, 0
        %v234 = vcvt.s32.f32 %v232
        %v235 = vcvt.s32.f32 %v233
        %v236 = vmul.f32 %v234, %v213
        %v237 = vmul.f32 %v235, %v215
        %v238 = vadd.f32 %v236, %v237
        %v239 = vrot.slane %v238, 4
        %v240 = vadd.f32 %v238, %v239
        %v241 = vrot.slane %v240, 2
        %v242 = vadd.f32 %v240, %v241
        %v243 = vrot.slane %v242, 1
        %v244 = vadd.f32 %v242, %v243
        %v245 = vrcp.pop %v222
        %v246 = vmul.f32 %v244, %v245
        %v247 = vadd.f32 %v246, 1e-19
        %v248 = vlog2.pop %v247
        %v249 = vmul.f32 %v248, 0.6931472
        %v250 = vsub.f32 1.0, %v247
        %v251 = vmul.f32 %v250, %v250
        %vm252 = vcmp.ge.s32.totalorder %v200, 0
        %v253 = vsel %vm252, 1, 0
        %v254 = vcvt.s32.f32 %v253
        %v255 = vsub.f32 0.0, %v251
        %v256 = vmul.f32 %v255, %v249
        %v257 = vmul.f32 %v256, %v254
        %259 = vset.pattern.permute.xlu0 0
        %260 = vperm.xlu0 %259, %v201
        %v261 = vpop.permute.xlu0 %260
        %264 = vset.pattern.permute.xlu0 0
        %265 = vperm.xlu0 %264, %v202
        %v266 = vpop.permute.xlu0 %265
        %v268 = vmul.f32 %v234, %v261
        %v269 = vmul.f32 %v235, %v266
        %v270 = vadd.f32 %v268, %v269
        %v271 = vrot.slane %v270, 4
        %v272 = vadd.f32 %v270, %v271
        %v273 = vrot.slane %v272, 2
        %v274 = vadd.f32 %v272, %v273
        %v275 = vrot.slane %v274, 1
        %v276 = vadd.f32 %v274, %v275
        %s277 = sld [smem:[#allocation2]]
        %vm278 = vcmask 1040384
        %v279 = vsel %vm278, %v276, 0.0
        %280 = vadd.xlane.f32.xlu0 %v279
        %v281 = vpop.xlane.xlu0 %280
        %v282 = vrot.slane %v281, 4
        %v283 = vadd.f32 %v281, %v282
        %v284 = vrot.slane %v283, 2
        %v285 = vadd.f32 %v283, %v284
        %v286 = vrot.slane %v285, 1
        %v287 = vadd.f32 %v285, %v286
        %s288 = vtos %v287
        %s289 = sadd.f32 %s277, %s288
        %s290 = scalar_lea.smem [#allocation2], 0
        %291 = sst [smem:[%s290]] %s289
        %s292 = sld [smem:[#allocation2 + $0x1]]
        %v293 = vsel %vm278, %v257, 0.0
        %294 = vadd.xlane.f32.xlu0 %v293
        %v295 = vpop.xlane.xlu0 %294
        %v296 = vrot.slane %v295, 4
        %v297 = vadd.f32 %v295, %v296
        %v298 = vrot.slane %v297, 2
        %v299 = vadd.f32 %v297, %v298
        %v300 = vrot.slane %v299, 1
        %v301 = vadd.f32 %v299, %v300
        %s302 = vtos %v301
        %s303 = sadd.f32 %s292, %s302
        %s304 = scalar_lea.smem [#allocation2], 1
        %305 = sst [smem:[%s304]] %s303
        %p306 = scmp.eq.s32.totalorder %s18, 2
        // Predicated region
        $region41: #{tpu_custom_call.1} parent=31 // pred_check
          %p307 = pneg %p306
        $region42: #{tpu_custom_call.1} parent=31 // pred_check_branch
          %309 = sbr.rel (%p307) target = $region44
        $region43: #{tpu_custom_call.1} parent=31 // pred_region
          %s310 = sld [smem:[#allocation2]]
          %s311 = sld [smem:[#allocation2 + $0x1]]
          %s312 = smul.f32 %s310, %s311
          %v313 = vrcp.pop 90000.0
          %s314 = vtos %v313
          %s315 = smul.f32 %s312, %s314
          %s316 = scalar_lea.smem [#allocation6], 0
          %317 = sst [smem:[%s316]] %s315
        $region44: #{tpu_custom_call.1} parent=31 // pred_fallthru
          _
        // Predicated region
        $region45: #{tpu_custom_call.1} parent=31 // pred_check
          %p318 = pneg %p104
        $region46: #{tpu_custom_call.1} parent=31 // pred_check_branch
          %320 = sbr.rel (%p318) target = $region48
        $region47: #{tpu_custom_call.1} parent=31 // pred_region
          %s322 = ssub.s32 16, 16
          %323 = vsyncadd [#allocation5], %s322
          %326 = dma.smem_to_hbm [#allocation6], 16, %s3, [#allocation5]
        $region48: #{tpu_custom_call.1} parent=31 // pred_fallthru
          _
        // Predicated region
        $region49: #{tpu_custom_call.1} parent=31 // pred_check
          %p327 = pneg %p104
        $region50: #{tpu_custom_call.1} parent=31 // pred_check_branch
          %329 = sbr.rel (%p327) target = $region52
        $region51: #{tpu_custom_call.1} parent=31 // pred_region
          %330 = dma.done [#allocation5], 16
        $region52: #{tpu_custom_call.1} parent=31 // pred_fallthru
          _
        %331 = sfence
      $region32: #{tpu_custom_call.1} parent=5 // pred_fallthru
        _
      %p332 = scmp.le.s32.totalorder 2, %s13
      // Predicated region
      $region53: #{tpu_custom_call.1} parent=5 // pred_check
        %p333 = pneg %p332
      $region54: #{tpu_custom_call.1} parent=5 // pred_check_branch
        %335 = sbr.rel (%p333) target = $region56
      $region55: #{tpu_custom_call.1} parent=5 // pred_region
        %s336 = ssub.s32 %s13, 2
      $region56: #{tpu_custom_call.1} parent=5 // pred_fallthru
        _
    $region6: #{tpu_custom_call.1} parent=1 // loop_footer
      %s17 = sadd.s32 1, %s13
    $region7: #{tpu_custom_call.1} parent=1 // loop_footer_branch
      %12 = sbr.rel target = $region3
    $region8: #{tpu_custom_call.1} parent=1 // loop_exit
      _
    %337 = vsyncpa [#allocation4], 1
    %s338 = scalar_lea.sflag [#allocation4], 1
    %339 = vsyncpa %s338, 1
    %340 = vsyncpa [#allocation5], 1
    %s341 = scalar_lea.sflag [#allocation5], 1
    %342 = vsyncpa %s341, 1

</llo_original>
